<compile_context>
chip_gen: v6e
topology: v6e:2x2x1
jax: 0.10.0
libtpu: 0.0.40
codegen_flags: <defaults>
</compile_context>

<pallas_src>
import functools

import jax
import jax.numpy as jnp
from jax.experimental import pallas as pl
from jax.experimental.pallas import tpu as pltpu


# Conservative budgets so double-buffered input streams fit v7x's 64 MiB VMEM.
_VMEM_INPUT_BUDGET = 32 * 1024 * 1024   # bytes for 2x-buffered wide input streams
_VMEM_LIMIT_BYTES = 48 * 1024 * 1024    # scoped VMEM limit handed to Mosaic
_MAX_CLASS_TILE = 2048                  # lanes per class tile (multiple of 128)
_MAX_BATCH_TILE = 1024


def _smooth_ce_hard_kernel(logits_ref, labels_ref, loss_ref,
                           m_ref, l_ref, s_ref, p_ref,
                           *, smoothing, num_classes, class_tile):
    """Smoothed CE for integer labels. Grid = (batch tiles, class tiles)."""
    kc = pl.program_id(1)

    @pl.when(kc == 0)
    def _init():
        m_ref[...] = jnp.full_like(m_ref, -jnp.inf)   # running row max
        l_ref[...] = jnp.zeros_like(l_ref)            # running sum exp(x - m)
        s_ref[...] = jnp.zeros_like(s_ref)            # running sum_c x
        p_ref[...] = jnp.zeros_like(p_ref)            # running x[label]

    x = logits_ref[...].astype(jnp.float32)           # (TB, TC)
    labels = labels_ref[...]                          # (TB, 1) int32

    # Online log-sum-exp over class tiles (numerically stable).
    m_prev = m_ref[...]
    m_new = jnp.maximum(m_prev, jnp.max(x, axis=1, keepdims=True))
    l_ref[...] = (l_ref[...] * jnp.exp(m_prev - m_new)
                  + jnp.sum(jnp.exp(x - m_new), axis=1, keepdims=True))
    m_ref[...] = m_new

    # Plain running sums (no max-rescaling needed).
    s_ref[...] = s_ref[...] + jnp.sum(x, axis=1, keepdims=True)
    col = jax.lax.broadcasted_iota(jnp.int32, x.shape, 1) + kc * class_tile
    p_ref[...] = p_ref[...] + jnp.sum(
        jnp.where(col == labels, x, 0.0), axis=1, keepdims=True)

    @pl.when(kc == pl.num_programs(1) - 1)
    def _finalize():
        lse = m_ref[...] + jnp.log(l_ref[...])
        loss = (lse
                - (1.0 - smoothing) * p_ref[...]
                - (smoothing / num_classes) * s_ref[...])
        loss_ref[...] = loss.astype(loss_ref.dtype)


def _smooth_ce_soft_kernel(logits_ref, target_ref, loss_ref,
                           m_ref, l_ref, s_ref, d_ref, t_ref,
                           *, smoothing, num_classes):
    """Smoothed CE for dense (soft / one-hot) targets."""
    kc = pl.program_id(1)

    @pl.when(kc == 0)
    def _init():
        m_ref[...] = jnp.full_like(m_ref, -jnp.inf)   # running row max
        l_ref[...] = jnp.zeros_like(l_ref)            # running sum exp(x - m)
        s_ref[...] = jnp.zeros_like(s_ref)            # running sum_c x
        d_ref[...] = jnp.zeros_like(d_ref)            # running sum_c t*x
        t_ref[...] = jnp.zeros_like(t_ref)            # running sum_c t

    x = logits_ref[...].astype(jnp.float32)           # (TB, TC)
    t = target_ref[...].astype(jnp.float32)           # (TB, TC)

    m_prev = m_ref[...]
    m_new = jnp.maximum(m_prev, jnp.max(x, axis=1, keepdims=True))
    l_ref[...] = (l_ref[...] * jnp.exp(m_prev - m_new)
                  + jnp.sum(jnp.exp(x - m_new), axis=1, keepdims=True))
    m_ref[...] = m_new

    s_ref[...] = s_ref[...] + jnp.sum(x, axis=1, keepdims=True)
    d_ref[...] = d_ref[...] + jnp.sum(t * x, axis=1, keepdims=True)
    t_ref[...] = t_ref[...] + jnp.sum(t, axis=1, keepdims=True)

    @pl.when(kc == pl.num_programs(1) - 1)
    def _finalize():
        lse = m_ref[...] + jnp.log(l_ref[...])
        w = 1.0 - smoothing
        loss = (lse * (w * t_ref[...] + smoothing)
                - w * d_ref[...]
                - (smoothing / num_classes) * s_ref[...])
        loss_ref[...] = loss.astype(loss_ref.dtype)


def _pick_class_tile(C):
    if C <= _MAX_CLASS_TILE or C % 128 != 0:
        # TODO(synk): pad/mask a partial last class tile instead of falling
        # back to a single full-width class block for awkward C.
        return C
    for k in range(_MAX_CLASS_TILE // 128, 0, -1):
        t = 128 * k
        if C % t == 0:
            return t
    return C


def _pick_batch_tile(B, per_row_bytes, sublane):
    tb = _VMEM_INPUT_BUDGET // (2 * max(per_row_bytes, 1))
    tb = max(sublane, (tb // sublane) * sublane)
    tb = min(int(tb), _MAX_BATCH_TILE)
    if tb >= B:
        return B
    return tb


def smooth_cross_entropy_loss(logits, target, smoothing=0.0, reduction="mean",
                              *, batch_tile=None, class_tile=None):
    """JAX/Pallas equivalent of SmoothCrossEntropyLoss.forward."""
    B, C = logits.shape
    smoothing = float(smoothing)
    hard = (target.ndim == 1)

    tc = class_tile if class_tile is not None else _pick_class_tile(C)
    assert C % tc == 0, "class tile must divide num_classes"

    logit_isz = jnp.dtype(logits.dtype).itemsize
    sublane = 8 * max(1, 4 // logit_isz)            # 8 for f32, 16 for bf16, ...
    per_row_bytes = tc * logit_isz
    if not hard:
        tgt_isz = jnp.dtype(target.dtype).itemsize
        sublane = max(sublane, 8 * max(1, 4 // tgt_isz))
        per_row_bytes += tc * tgt_isz

    tb = batch_tile if batch_tile is not None else _pick_batch_tile(
        B, per_row_bytes, sublane)

    grid = (pl.cdiv(B, tb), C // tc)
    logits_spec = pl.BlockSpec((tb, tc), lambda i, kc: (i, kc))
    out_spec = pl.BlockSpec((tb, 1), lambda i, kc: (i, 0))
    out_shape = jax.ShapeDtypeStruct((B, 1), jnp.float32)
    compiler_params = pltpu.CompilerParams(
        dimension_semantics=("parallel", "arbitrary"),
        vmem_limit_bytes=_VMEM_LIMIT_BYTES,
    )

    def _col():
        return pltpu.VMEM((tb, 1), jnp.float32)

    if hard:
        kern = functools.partial(_smooth_ce_hard_kernel, smoothing=smoothing,
                                 num_classes=C, class_tile=tc)
        labels = target.astype(jnp.int32).reshape(B, 1)
        per_row_loss = pl.pallas_call(
            kern,
            out_shape=out_shape,
            grid=grid,
            in_specs=[
                logits_spec,
                # TODO(synk): labels could go to SMEM / scalar-prefetch, but the
                # in-kernel one-hot compare needs a vector value, so a tiny
                # (TB, 1) VMEM block is used instead.
                pl.BlockSpec((tb, 1), lambda i, kc: (i, 0)),
            ],
            out_specs=out_spec,
            scratch_shapes=[_col() for _ in range(4)],
            compiler_params=compiler_params,
        )(logits, labels)
    else:
        kern = functools.partial(_smooth_ce_soft_kernel, smoothing=smoothing,
                                 num_classes=C)
        target_spec = pl.BlockSpec((tb, tc), lambda i, kc: (i, kc))
        per_row_loss = pl.pallas_call(
            kern,
            out_shape=out_shape,
            grid=grid,
            in_specs=[logits_spec, target_spec],
            out_specs=out_spec,
            scratch_shapes=[_col() for _ in range(5)],
            compiler_params=compiler_params,
        )(logits, target)

    loss = per_row_loss[:, 0]                        # (B,) float32
    if reduction == "mean":
        return loss.mean()
    if reduction == "sum":
        return loss.sum()
    return loss


def _reference(logits, target, smoothing, reduction):
    """Pure-JAX reference mirroring the PyTorch module exactly."""
    num_classes = logits.shape[1]
    if target.ndim == 1:
        target = jax.nn.one_hot(target, num_classes, dtype=jnp.float32)
    target = (1.0 - smoothing) * target + smoothing / num_classes
    logprobs = jax.nn.log_softmax(logits.astype(jnp.float32), axis=1)
    loss = -(target * logprobs).sum(axis=1)
    if reduction == "mean":
        return loss.mean()
    elif reduction == "sum":
        return loss.sum()
    return loss


if __name__ == "__main__":
    key = jax.random.PRNGKey(0)
    k_logits, k_labels, k_big = jax.random.split(key, 3)

    smoothing = 0.1

    # --- Small config: hard labels + soft targets, single grid step. ---
    B, C = 8, 32
    logits = jax.random.normal(k_logits, (B, C), dtype=jnp.float32)
    labels = jax.random.randint(k_labels, (B,), 0, C, dtype=jnp.int32)

    out = smooth_cross_entropy_loss(logits, labels, smoothing=smoothing,
                                    reduction="mean")
    out = jax.block_until_ready(out)
    ref = _reference(logits, labels, smoothing, "mean")
    assert jnp.allclose(out, ref, atol=1e-5, rtol=1e-5), (out, ref)

    soft_tgt = jax.nn.one_hot(labels, C, dtype=jnp.float32)
    out_none = smooth_cross_entropy_loss(logits, soft_tgt, smoothing=smoothing,
                                         reduction="none")
    out_none = jax.block_until_ready(out_none)
    ref_none = _reference(logits, soft_tgt, smoothing, "none")
    assert jnp.allclose(out_none, ref_none, atol=1e-5, rtol=1e-5)

    # --- Multi-tile config: exercises the online-LSE class-axis accumulation
    #     and the pipelined batch grid (2 batch tiles x 2 class tiles). ---
    B2, C2 = 16, 256
    logits2 = jax.random.normal(k_big, (B2, C2), dtype=jnp.float32)
    labels2 = jax.random.randint(k_labels, (B2,), 0, C2, dtype=jnp.int32)
    out2 = smooth_cross_entropy_loss(logits2, labels2, smoothing=smoothing,
                                     reduction="none",
                                     batch_tile=8, class_tile=128)
    out2 = jax.block_until_ready(out2)
    ref2 = _reference(logits2, labels2, smoothing, "none")
    assert jnp.allclose(out2, ref2, atol=1e-5, rtol=1e-5), (out2, ref2)

    # --- bf16 logits streamed natively, f32 math inside the kernel. ---
    logits_bf16 = logits2.astype(jnp.bfloat16)
    out3 = smooth_cross_entropy_loss(logits_bf16, labels2, smoothing=smoothing,
                                     reduction="sum")
    out3 = jax.block_until_ready(out3)
    ref3 = _reference(logits_bf16, labels2, smoothing, "sum")
    assert jnp.allclose(out3, ref3, atol=1e-3, rtol=1e-4), (out3, ref3)

    print("KERNEL_OK")
</pallas_src>

<mosaic_0001>
module attributes {stable_mosaic.version = 11 : i64} {
  func.func @_smooth_ce_hard_kernel(%arg0: i32, %arg1: i32, %arg2: memref<8x32xf32, #tpu.memory_space<vmem>>, %arg3: memref<8x1xi32, #tpu.memory_space<vmem>>, %arg4: memref<8x1xf32, #tpu.memory_space<vmem>>, %arg5: memref<8x1xf32, #tpu.memory_space<vmem>>, %arg6: memref<8x1xf32, #tpu.memory_space<vmem>>, %arg7: memref<8x1xf32, #tpu.memory_space<vmem>>, %arg8: memref<8x1xf32, #tpu.memory_space<vmem>>) attributes {dimension_semantics = [#tpu.dimension_semantics<parallel>, #tpu.dimension_semantics<arbitrary>], iteration_bounds = array<i64: 1, 1>, scalar_prefetch = 0 : i64, scratch_operands = 4 : i64, tpu.core_type = #tpu.core_type<tc>, window_params = [{transform_indices = @transform_0, window_bounds = array<i64: 8, 32>}, {transform_indices = @transform_1, window_bounds = array<i64: 8, 1>}, {transform_indices = @transform_2, window_bounds = array<i64: 8, 1>}]} {
    %c0_i32 = arith.constant 0 : i32
    %0 = arith.cmpi eq, %arg1, %c0_i32 : i32
    %1 = arith.extui %0 : i1 to i32
    %c0_i32_0 = arith.constant 0 : i32
    %2 = arith.cmpi ne, %1, %c0_i32_0 : i32
    scf.if %2 {
      %cst_26 = arith.constant 0xFF800000 : f32
      %42 = vector.broadcast %cst_26 : f32 to vector<8x1xf32>
      %c0_27 = arith.constant 0 : index
      %c0_28 = arith.constant 0 : index
      %43 = vector.load %arg5[%c0_27, %c0_28] : memref<8x1xf32, #tpu.memory_space<vmem>>, vector<8x1xf32>
      tpu.vector_store %arg5[%c0_27, %c0_28], %42 {strides = array<i32>} : memref<8x1xf32, #tpu.memory_space<vmem>>, vector<8x1xf32>,
      %cst_29 = arith.constant 0.000000e+00 : f32
      %44 = vector.broadcast %cst_29 : f32 to vector<8x1xf32>
      %c0_30 = arith.constant 0 : index
      %c0_31 = arith.constant 0 : index
      %45 = vector.load %arg6[%c0_30, %c0_31] : memref<8x1xf32, #tpu.memory_space<vmem>>, vector<8x1xf32>
      tpu.vector_store %arg6[%c0_30, %c0_31], %44 {strides = array<i32>} : memref<8x1xf32, #tpu.memory_space<vmem>>, vector<8x1xf32>,
      %cst_32 = arith.constant 0.000000e+00 : f32
      %46 = vector.broadcast %cst_32 : f32 to vector<8x1xf32>
      %c0_33 = arith.constant 0 : index
      %c0_34 = arith.constant 0 : index
      %47 = vector.load %arg7[%c0_33, %c0_34] : memref<8x1xf32, #tpu.memory_space<vmem>>, vector<8x1xf32>
      tpu.vector_store %arg7[%c0_33, %c0_34], %46 {strides = array<i32>} : memref<8x1xf32, #tpu.memory_space<vmem>>, vector<8x1xf32>,
      %cst_35 = arith.constant 0.000000e+00 : f32
      %48 = vector.broadcast %cst_35 : f32 to vector<8x1xf32>
      %c0_36 = arith.constant 0 : index
      %c0_37 = arith.constant 0 : index
      %49 = vector.load %arg8[%c0_36, %c0_37] : memref<8x1xf32, #tpu.memory_space<vmem>>, vector<8x1xf32>
      tpu.vector_store %arg8[%c0_36, %c0_37], %48 {strides = array<i32>} : memref<8x1xf32, #tpu.memory_space<vmem>>, vector<8x1xf32>,
    } else {
    }
    %c0 = arith.constant 0 : index
    %c0_1 = arith.constant 0 : index
    %3 = vector.load %arg2[%c0, %c0_1] : memref<8x32xf32, #tpu.memory_space<vmem>>, vector<8x32xf32>
    %c0_2 = arith.constant 0 : index
    %c0_3 = arith.constant 0 : index
    %4 = vector.load %arg3[%c0_2, %c0_3] : memref<8x1xi32, #tpu.memory_space<vmem>>, vector<8x1xi32>
    %c0_4 = arith.constant 0 : index
    %c0_5 = arith.constant 0 : index
    %5 = vector.load %arg5[%c0_4, %c0_5] : memref<8x1xf32, #tpu.memory_space<vmem>>, vector<8x1xf32>
    %cst = arith.constant dense<0xFF800000> : vector<8xf32>
    %6 = vector.multi_reduction <maximumf>, %3, %cst [1] : vector<8x32xf32> to vector<8xf32>
    %7 = vector.shape_cast %6 : vector<8xf32> to vector<8x1xf32>
    %8 = arith.maximumf %5, %7 : vector<8x1xf32>
    %c0_6 = arith.constant 0 : index
    %c0_7 = arith.constant 0 : index
    %9 = vector.load %arg6[%c0_6, %c0_7] : memref<8x1xf32, #tpu.memory_space<vmem>>, vector<8x1xf32>
    %10 = arith.subf %5, %8 : vector<8x1xf32>
    %11 = math.exp %10 : vector<8x1xf32>
    %12 = arith.mulf %9, %11 : vector<8x1xf32>
    %13 = vector.broadcast %8 : vector<8x1xf32> to vector<8x32xf32>
    %14 = arith.subf %3, %13 : vector<8x32xf32>
    %15 = math.exp %14 : vector<8x32xf32>
    %cst_8 = arith.constant dense<0.000000e+00> : vector<8xf32>
    %16 = vector.multi_reduction <add>, %15, %cst_8 [1] : vector<8x32xf32> to vector<8xf32>
    %17 = vector.shape_cast %16 : vector<8xf32> to vector<8x1xf32>
    %18 = arith.addf %12, %17 : vector<8x1xf32>
    %c0_9 = arith.constant 0 : index
    %c0_10 = arith.constant 0 : index
    %19 = vector.load %arg6[%c0_9, %c0_10] : memref<8x1xf32, #tpu.memory_space<vmem>>, vector<8x1xf32>
    tpu.vector_store %arg6[%c0_9, %c0_10], %18 {strides = array<i32>} : memref<8x1xf32, #tpu.memory_space<vmem>>, vector<8x1xf32>,
    %c0_11 = arith.constant 0 : index
    %c0_12 = arith.constant 0 : index
    %20 = vector.load %arg5[%c0_11, %c0_12] : memref<8x1xf32, #tpu.memory_space<vmem>>, vector<8x1xf32>
    tpu.vector_store %arg5[%c0_11, %c0_12], %8 {strides = array<i32>} : memref<8x1xf32, #tpu.memory_space<vmem>>, vector<8x1xf32>,
    %c0_13 = arith.constant 0 : index
    %c0_14 = arith.constant 0 : index
    %21 = vector.load %arg7[%c0_13, %c0_14] : memref<8x1xf32, #tpu.memory_space<vmem>>, vector<8x1xf32>
    %cst_15 = arith.constant dense<0.000000e+00> : vector<8xf32>
    %22 = vector.multi_reduction <add>, %3, %cst_15 [1] : vector<8x32xf32> to vector<8xf32>
    %23 = vector.shape_cast %22 : vector<8xf32> to vector<8x1xf32>
    %24 = arith.addf %21, %23 : vector<8x1xf32>
    %c0_16 = arith.constant 0 : index
    %c0_17 = arith.constant 0 : index
    %25 = vector.load %arg7[%c0_16, %c0_17] : memref<8x1xf32, #tpu.memory_space<vmem>>, vector<8x1xf32>
    tpu.vector_store %arg7[%c0_16, %c0_17], %24 {strides = array<i32>} : memref<8x1xf32, #tpu.memory_space<vmem>>, vector<8x1xf32>,
    %26 = tpu.iota {dimensions = array<i32: 1>} : vector<8x32xi32>
    %c32_i32 = arith.constant 32 : i32
    %27 = arith.muli %arg1, %c32_i32 : i32
    %28 = vector.broadcast %27 : i32 to vector<8x32xi32>
    %29 = arith.addi %26, %28 : vector<8x32xi32>
    %c0_18 = arith.constant 0 : index
    %c0_19 = arith.constant 0 : index
    %30 = vector.load %arg8[%c0_18, %c0_19] : memref<8x1xf32, #tpu.memory_space<vmem>>, vector<8x1xf32>
    %31 = vector.broadcast %4 : vector<8x1xi32> to vector<8x32xi32>
    %32 = arith.cmpi eq, %29, %31 : vector<8x32xi32>
    %cst_20 = arith.constant 0.000000e+00 : f32
    %33 = vector.broadcast %cst_20 : f32 to vector<8x32xf32>
    %34 = arith.select %32, %3, %33 : vector<8x32xi1>, vector<8x32xf32>
    %cst_21 = arith.constant dense<0.000000e+00> : vector<8xf32>
    %35 = vector.multi_reduction <add>, %34, %cst_21 [1] : vector<8x32xf32> to vector<8xf32>
    %36 = vector.shape_cast %35 : vector<8xf32> to vector<8x1xf32>
    %37 = arith.addf %30, %36 : vector<8x1xf32>
    %c0_22 = arith.constant 0 : index
    %c0_23 = arith.constant 0 : index
    %38 = vector.load %arg8[%c0_22, %c0_23] : memref<8x1xf32, #tpu.memory_space<vmem>>, vector<8x1xf32>
    tpu.vector_store %arg8[%c0_22, %c0_23], %37 {strides = array<i32>} : memref<8x1xf32, #tpu.memory_space<vmem>>, vector<8x1xf32>,
    %c0_i32_24 = arith.constant 0 : i32
    %39 = arith.cmpi eq, %arg1, %c0_i32_24 : i32
    %40 = arith.extui %39 : i1 to i32
    %c0_i32_25 = arith.constant 0 : i32
    %41 = arith.cmpi ne, %40, %c0_i32_25 : i32
    scf.if %41 {
      %c0_26 = arith.constant 0 : index
      %c0_27 = arith.constant 0 : index
      %42 = vector.load %arg5[%c0_26, %c0_27] : memref<8x1xf32, #tpu.memory_space<vmem>>, vector<8x1xf32>
      %c0_28 = arith.constant 0 : index
      %c0_29 = arith.constant 0 : index
      %43 = vector.load %arg6[%c0_28, %c0_29] : memref<8x1xf32, #tpu.memory_space<vmem>>, vector<8x1xf32>
      %44 = math.log %43 : vector<8x1xf32>
      %45 = arith.addf %42, %44 : vector<8x1xf32>
      %c0_30 = arith.constant 0 : index
      %c0_31 = arith.constant 0 : index
      %46 = vector.load %arg8[%c0_30, %c0_31] : memref<8x1xf32, #tpu.memory_space<vmem>>, vector<8x1xf32>
      %cst_32 = arith.constant 0.899999976 : f32
      %47 = vector.broadcast %cst_32 : f32 to vector<8x1xf32>
      %48 = arith.mulf %47, %46 : vector<8x1xf32>
      %49 = arith.subf %45, %48 : vector<8x1xf32>
      %c0_33 = arith.constant 0 : index
      %c0_34 = arith.constant 0 : index
      %50 = vector.load %arg7[%c0_33, %c0_34] : memref<8x1xf32, #tpu.memory_space<vmem>>, vector<8x1xf32>
      %cst_35 = arith.constant 3.125000e-03 : f32
      %51 = vector.broadcast %cst_35 : f32 to vector<8x1xf32>
      %52 = arith.mulf %51, %50 : vector<8x1xf32>
      %53 = arith.subf %49, %52 : vector<8x1xf32>
      %c0_36 = arith.constant 0 : index
      %c0_37 = arith.constant 0 : index
      %54 = vector.load %arg4[%c0_36, %c0_37] : memref<8x1xf32, #tpu.memory_space<vmem>>, vector<8x1xf32>
      tpu.vector_store %arg4[%c0_36, %c0_37], %53 {strides = array<i32>} : memref<8x1xf32, #tpu.memory_space<vmem>>, vector<8x1xf32>,
    } else {
    }
    return
  }
  func.func @transform_0(%arg0: i32, %arg1: i32) -> (i32, i32) {
    %c0_i32 = arith.constant 0 : i32
    return %arg0, %arg1 : i32, i32
  }
  func.func @transform_1(%arg0: i32, %arg1: i32) -> (i32, i32) {
    %c0_i32 = arith.constant 0 : i32
    %c0_i32_0 = arith.constant 0 : i32
    return %arg0, %c0_i32 : i32, i32
  }
  func.func @transform_2(%arg0: i32, %arg1: i32) -> (i32, i32) {
    %c0_i32 = arith.constant 0 : i32
    %c0_i32_0 = arith.constant 0 : i32
    return %arg0, %c0_i32 : i32, i32
  }
}

</mosaic_0001>

<llo_original>
// kernel: tpu_custom_call.1
$region0: #{tpu_custom_call.1}
  #allocation0 [shape = 'u32[]', space=smem, size = 0x4, offset = 0x4, fixed_abs, tag = 'smem constant byte address 0x4 - core index']
  #allocation1 [shape = 'u32[144,128]{1,0:T(1,128)}', space=vmem, size = 0x12000, scoped, tag = 'internal scratch']
  #allocation2 [shape = 'f32[8,1]{1,0:T(8,128)}', space=vmem, size = 0x1000, scoped, tag = 'scratch operand']
  #allocation3 [shape = 'f32[8,1]{1,0:T(8,128)}', space=vmem, size = 0x1000, scoped, tag = 'scratch operand']
  #allocation4 [shape = 'f32[8,1]{1,0:T(8,128)}', space=vmem, size = 0x1000, scoped, tag = 'scratch operand']
  #allocation5 [shape = 'f32[8,1]{1,0:T(8,128)}', space=vmem, size = 0x1000, scoped, tag = 'scratch operand']
  %s0 = inlined_call_operand.vmem [shape: f32[8,32], index: 0, kind: input, shape index: {}]
  %s1 = inlined_call_operand.vmem [shape: s32[8,1], index: 1, kind: input, shape index: {}]
  %s2 = inlined_call_operand.vmem [shape: f32[8,1], index: 2, kind: output, shape index: {}]
  %s3 = sld [smem:[#allocation0]]
  $region26: #{tpu_custom_call.1} parent=0
    _
  %s5 = ssub.s32 1, %s3
  %s6 = scalar_select 0, %s5, %s3
  // Predicated region
  $region2: #{tpu_custom_call.1} parent=0 // pred_check
    _
  $region3: #{tpu_custom_call.1} parent=0 // pred_check_branch
    %8 = sbr.rel (0) target = $region5
  $region4: #{tpu_custom_call.1} parent=0 // pred_region
    _
  $region5: #{tpu_custom_call.1} parent=0 // pred_fallthru
    _
  // Predicated region
  $region6: #{tpu_custom_call.1} parent=0 // pred_check
    _
  $region7: #{tpu_custom_call.1} parent=0 // pred_check_branch
    %10 = sbr.rel (0) target = $region9
  $region8: #{tpu_custom_call.1} parent=0 // pred_region
    _
  $region9: #{tpu_custom_call.1} parent=0 // pred_fallthru
    _
  %p11 = scmp.eq.s32.totalorder 0, 0
  // Predicated region
  $region10: #{tpu_custom_call.1} parent=0 // pred_check
    %p12 = pneg %p11
  $region11: #{tpu_custom_call.1} parent=0 // pred_check_branch
    %14 = sbr.rel (%p12) target = $region13
  $region12: #{tpu_custom_call.1} parent=0 // pred_region
    %vm15 = vcmask 7168
    %16 = vst.msk [vmem:[#allocation2] sm:$0xff] %vm15, -inf
    %17 = vst.msk [vmem:[#allocation3] sm:$0xff] %vm15, 0.0
    %18 = vst.msk [vmem:[#allocation4] sm:$0xff] %vm15, 0.0
    %19 = vst.msk [vmem:[#allocation5] sm:$0xff] %vm15, 0.0
  $region13: #{tpu_custom_call.1} parent=0 // pred_fallthru
    _
  %v20 = vld [vmem:[%s0] sm:$0xff]
  %v21 = vld [vmem:[%s1] sm:$0xff]
  %v22 = vld [vmem:[#allocation2] sm:$0xff]
  %vm23 = vcmask 261120
  %v24 = vsel %vm23, %v20, -inf
  %25 = vmax.xlane.f32.xlu0 %v24
  %v26 = vpop.xlane.xlu0 %25
  %v27 = vmax.f32 %v22, %v26
  %v28 = vld [vmem:[#allocation3] sm:$0xff]
  %v29 = vsub.f32 %v22, %v27
  %v30 = vmul.f32 %v29, 1.442695
  %v31 = vpow.pop %v30
  %v32 = vmul.f32 %v28, %v31
  %34 = vset.pattern.permute.xlu0 0
  %35 = vperm.xlu0 %34, %v27
  %v36 = vpop.permute.xlu0 %35
  %v38 = vsub.f32 %v20, %v36
  %v39 = vmul.f32 %v38, 1.442695
  %v40 = vpow.pop %v39
  %v41 = vsel %vm23, %v40, 0.0
  %42 = vadd.xlane.f32.xlu0 %v41
  %v43 = vpop.xlane.xlu0 %42
  %v44 = vadd.f32 %v32, %v43
  %vm45 = vcmask 7168
  %46 = vst.msk [vmem:[#allocation3] sm:$0xff] %vm45, %v44
  %47 = vst.msk [vmem:[#allocation2] sm:$0xff] %vm45, %v27
  %v48 = vld [vmem:[#allocation4] sm:$0xff]
  %v49 = vsel %vm23, %v20, 0.0
  %50 = vadd.xlane.f32.xlu0 %v49
  %v51 = vpop.xlane.xlu0 %50
  %v52 = vadd.f32 %v48, %v51
  %53 = vst.msk [vmem:[#allocation4] sm:$0xff] %vm45, %v52
  %v54 = vlaneseq
  %v55 = vand.u32 %v54, 127
  %s56 = smul.u32 0, 32
  %v57 = vstv %s56
  %v58 = vadd.s32 %v55, %v57
  %v59 = vld [vmem:[#allocation5] sm:$0xff]
  %60 = vset.pattern.permute.xlu0 0
  %61 = vperm.xlu0 %60, %v21
  %v62 = vpop.permute.xlu0 %61
  %vm63 = vcmp.eq.s32.totalorder %v58, %v62
  %v64 = vsel %vm63, %v20, 0.0
  %v65 = vsel %vm23, %v64, 0.0
  %66 = vadd.xlane.f32.xlu0 %v65
  %v67 = vpop.xlane.xlu0 %66
  %v68 = vadd.f32 %v59, %v67
  %69 = vst.msk [vmem:[#allocation5] sm:$0xff] %vm45, %v68
  // Predicated region
  $region14: #{tpu_custom_call.1} parent=0 // pred_check
    %p70 = pneg %p11
  $region15: #{tpu_custom_call.1} parent=0 // pred_check_branch
    %72 = sbr.rel (%p70) target = $region17
  $region16: #{tpu_custom_call.1} parent=0 // pred_region
    %v73 = vld [vmem:[#allocation2] sm:$0xff]
    %v74 = vld [vmem:[#allocation3] sm:$0xff]
    %v75 = vlog2.pop %v74
    %v76 = vmul.f32 %v75, 0.6931472
    %v77 = vadd.f32 %v73, %v76
    %v78 = vld [vmem:[#allocation5] sm:$0xff]
    %v79 = vmul.f32 %v78, 0.9
    %v80 = vsub.f32 %v77, %v79
    %v81 = vld [vmem:[#allocation4] sm:$0xff]
    %v82 = vmul.f32 %v81, 0.003125
    %v83 = vsub.f32 %v80, %v82
    %84 = vst.msk [vmem:[%s2] sm:$0xff] %vm45, %v83
  $region17: #{tpu_custom_call.1} parent=0 // pred_fallthru
    _
  // Predicated region
  $region18: #{tpu_custom_call.1} parent=0 // pred_check
    _
  $region19: #{tpu_custom_call.1} parent=0 // pred_check_branch
    %86 = sbr.rel (0) target = $region21
  $region20: #{tpu_custom_call.1} parent=0 // pred_region
    _
  $region21: #{tpu_custom_call.1} parent=0 // pred_fallthru
    _
  // Predicated region
  $region22: #{tpu_custom_call.1} parent=0 // pred_check
    _
  $region23: #{tpu_custom_call.1} parent=0 // pred_check_branch
    %88 = sbr.rel (0) target = $region25
  $region24: #{tpu_custom_call.1} parent=0 // pred_region
    _
  $region25: #{tpu_custom_call.1} parent=0 // pred_fallthru
    _

</llo_original>
